<compile_context>
chip_gen: v5e
topology: v5e:2x2
jax: 0.10.0
libtpu: 0.0.40
codegen_flags: <defaults>
</compile_context>

<pallas_src>
import jax
import jax.numpy as jnp
from jax.experimental import pallas as pl
from jax.experimental.pallas import tpu as pltpu

H1, H2 = 1000, 500     # logical (PyTorch) hidden sizes
H2P = 512              # lane-padded (multiple of 128)


def lr_kernel(x_ref, p_ref, o_ref):
    # p_ref rows: 0 = w2_eff (= w1 @ W2), 1 = b2_eff (= b1 @ W2 + b2),
    #             2 = w3 row (Linear(500,1).weight), 3 = [b3, 0, ...]
    x = x_ref[...]                            # (B, 1)
    w2_eff = p_ref[0:1, :]                    # (1, H2P)
    b2_eff = p_ref[1:2, :]                    # (1, H2P)
    w3_row = p_ref[2:3, :]                    # (1, H2P)
    b3 = p_ref[3:4, 0:1]                      # (1, 1)

    # Layers 1+2 folded: ((x @ w1 + b1) @ W2 + b2) == x * (w1 @ W2) + (b1 @ W2 + b2).
    # VPU broadcast FMA, (B,1) * (1,H2P) -> (B,H2P).
    h2 = x * w2_eff + b2_eff
    # nn.LeakyReLU(True) == LeakyReLU(negative_slope=1.0) == identity: dropped here.

    # Layer 3: Linear(500, 1). Output dim N == 1, so avoid a 1-lane MXU result:
    # VPU elementwise multiply by the (1, H2P) weight row + XLU lane reduction.
    out = jnp.sum(h2 * w3_row, axis=-1, keepdims=True) + b3   # (B, 1)
    o_ref[...] = out.astype(o_ref.dtype)


def lr_forward(x, param_slab):
    B = x.shape[0]
    return pl.pallas_call(
        lr_kernel,
        out_shape=jax.ShapeDtypeStruct((B, 1), jnp.float32),
        grid=(),
        in_specs=[
            pl.BlockSpec(x.shape, lambda: (0, 0)),
            pl.BlockSpec(param_slab.shape, lambda: (0, 0)),
        ],
        out_specs=pl.BlockSpec((B, 1), lambda: (0, 0)),
        compiler_params=pltpu.CompilerParams(vmem_limit_bytes=4 << 20),
    )(x, param_slab)


def init_params(key):
    """Deterministic synthetic params with the same shapes as the PyTorch module.

    PyTorch stores Linear weights as (out, in); we keep them as (in, out) so the
    math is x @ W + b. Uses torch's default Uniform(-1/sqrt(fan_in), 1/sqrt(fan_in)).
    """
    ks = jax.random.split(key, 6)

    def unif(k, shape, fan_in):
        bound = 1.0 / (fan_in ** 0.5)
        return jax.random.uniform(k, shape, jnp.float32, -bound, bound)

    w1 = unif(ks[0], (1, H1), 1)       # Linear(1, 1000).weight.T
    b1 = unif(ks[1], (1, H1), 1)       # Linear(1, 1000).bias (row)
    w2 = unif(ks[2], (H1, H2), H1)     # Linear(1000, 500).weight.T
    b2 = unif(ks[3], (1, H2), H1)      # Linear(1000, 500).bias (row)
    w3 = unif(ks[4], (H2, 1), H2)      # Linear(500, 1).weight.T
    b3 = unif(ks[5], (1, 1), H2)       # Linear(500, 1).bias
    return w1, b1, w2, b2, w3, b3


def fold_params(params):
    """One-time host-side fold of layer 1 into layer 2 + packing into one slab.

    Exact because the intervening LeakyReLU has negative_slope == 1.0 (identity)
    and zero padding to 512 lanes contributes 0.0.
    Slab layout (4, 512): row 0 w2_eff, row 1 b2_eff, row 2 w3 row, row 3 [b3, 0...].
    """
    w1, b1, w2, b2, w3, b3 = params
    w2_eff = w1 @ w2            # (1, H2)
    b2_eff = b1 @ w2 + b2       # (1, H2)
    w3_row = w3.T               # (1, H2)

    slab = jnp.zeros((4, H2P), jnp.float32)
    slab = slab.at[0, :H2].set(w2_eff[0])
    slab = slab.at[1, :H2].set(b2_eff[0])
    slab = slab.at[2, :H2].set(w3_row[0])
    slab = slab.at[3, 0].set(b3[0, 0])
    return slab


if __name__ == "__main__":
    key = jax.random.PRNGKey(0)
    k_x, k_p = jax.random.split(key)

    B = 8
    x = jax.random.normal(k_x, (B, 1), jnp.float32)
    params = init_params(k_p)
    slab = jax.block_until_ready(fold_params(params))   # fold once, outside the kernel

    out = jax.block_until_ready(lr_forward(x, slab))

    # Pure-JAX layer-by-layer reference on the UNFOLDED params
    # (LeakyReLU(negative_slope=1.0) is the identity).
    w1, b1, w2, b2, w3, b3 = params
    h1 = x @ w1 + b1
    h2 = h1 @ w2 + b2
    ref = h2 @ w3 + b3

    assert out.shape == (B, 1)
    assert jnp.allclose(out, ref, atol=1e-4, rtol=1e-4)

    print("KERNEL_OK")
</pallas_src>

<mosaic_0001>
module attributes {stable_mosaic.version = 11 : i64} {
  func.func @lr_kernel(%arg0: memref<8x1xf32, #tpu.memory_space<vmem>>, %arg1: memref<4x512xf32, #tpu.memory_space<vmem>>, %arg2: memref<8x1xf32, #tpu.memory_space<vmem>>) attributes {dimension_semantics = [], scalar_prefetch = 0 : i64, scratch_operands = 0 : i64, tpu.core_type = #tpu.core_type<tc>} {
    %c0 = arith.constant 0 : index
    %c0_0 = arith.constant 0 : index
    %0 = vector.load %arg0[%c0, %c0_0] : memref<8x1xf32, #tpu.memory_space<vmem>>, vector<8x1xf32>
    %c0_1 = arith.constant 0 : index
    %c0_2 = arith.constant 0 : index
    %1 = vector.load %arg1[%c0_1, %c0_2] : memref<4x512xf32, #tpu.memory_space<vmem>>, vector<1x512xf32>
    %c1 = arith.constant 1 : index
    %c0_3 = arith.constant 0 : index
    %2 = vector.load %arg1[%c1, %c0_3] : memref<4x512xf32, #tpu.memory_space<vmem>>, vector<1x512xf32>
    %c2 = arith.constant 2 : index
    %c0_4 = arith.constant 0 : index
    %3 = vector.load %arg1[%c2, %c0_4] : memref<4x512xf32, #tpu.memory_space<vmem>>, vector<1x512xf32>
    %c3 = arith.constant 3 : index
    %c0_5 = arith.constant 0 : index
    %4 = vector.load %arg1[%c3, %c0_5] : memref<4x512xf32, #tpu.memory_space<vmem>>, vector<1x1xf32>
    %5 = vector.broadcast %0 : vector<8x1xf32> to vector<8x512xf32>
    %6 = vector.broadcast %1 : vector<1x512xf32> to vector<8x512xf32>
    %7 = arith.mulf %5, %6 : vector<8x512xf32>
    %8 = vector.broadcast %2 : vector<1x512xf32> to vector<8x512xf32>
    %9 = arith.addf %7, %8 : vector<8x512xf32>
    %10 = vector.broadcast %3 : vector<1x512xf32> to vector<8x512xf32>
    %11 = arith.mulf %9, %10 : vector<8x512xf32>
    %cst = arith.constant dense<0.000000e+00> : vector<8xf32>
    %12 = vector.multi_reduction <add>, %11, %cst [1] : vector<8x512xf32> to vector<8xf32>
    %13 = vector.shape_cast %12 : vector<8xf32> to vector<8x1xf32>
    %14 = vector.broadcast %4 : vector<1x1xf32> to vector<8x1xf32>
    %15 = arith.addf %13, %14 : vector<8x1xf32>
    %c0_6 = arith.constant 0 : index
    %c0_7 = arith.constant 0 : index
    %16 = vector.load %arg2[%c0_6, %c0_7] : memref<8x1xf32, #tpu.memory_space<vmem>>, vector<8x1xf32>
    tpu.vector_store %arg2[%c0_6, %c0_7], %15 {strides = array<i32>} : memref<8x1xf32, #tpu.memory_space<vmem>>, vector<8x1xf32>,
    return
  }
}

</mosaic_0001>

<llo_original>
// kernel: tpu_custom_call.1
$region0: #{tpu_custom_call.1}
  #allocation0 [shape = 'u32[]', space=smem, size = 0x4, offset = 0x4, fixed_abs, tag = 'smem constant byte address 0x4 - core index']
  #allocation1 [shape = 'u32[72,128]{1,0:T(1,128)}', space=vmem, size = 0x9000, scoped, tag = 'internal scratch']
  %s0 = inlined_call_operand.vmem [shape: f32[8,1], index: 0, kind: input, shape index: {}]
  %s1 = inlined_call_operand.hbm [shape: f32[4,512], index: 1, kind: input, shape index: {}]
  %s2 = inlined_call_operand.vmem [shape: f32[8,1], index: 2, kind: output, shape index: {}]
  %s3 = sld [smem:[#allocation0]]
  $region22: #{tpu_custom_call.1} parent=0
    _
  %s5 = ssub.s32 1, %s3
  %s6 = scalar_select 0, %s5, %s3
  $region1: #{tpu_custom_call.1} parent=0
    #allocation2 [shape = 'u8[8192]{0}', space=vmem, size = 0x2000, scoped, tag = 'input window, operand 1, single buffered']
    #allocation3 [shape = 's32[1]{0}', space=sflag, size = 0x4, scoped, tag = 'scoped memory for tpu_custom_call.1']
    %7 = vsyncpa [#allocation3], 0
    // Predicated region
    $region2: #{tpu_custom_call.1} parent=1 // pred_check
      _
    $region3: #{tpu_custom_call.1} parent=1 // pred_check_branch
      %9 = sbr.rel (0) target = $region5
    $region4: #{tpu_custom_call.1} parent=1 // pred_region
      _
    $region5: #{tpu_custom_call.1} parent=1 // pred_fallthru
      _
    // Predicated region
    $region6: #{tpu_custom_call.1} parent=1 // pred_check
      _
    $region7: #{tpu_custom_call.1} parent=1 // pred_check_branch
      %11 = sbr.rel (0) target = $region9
    $region8: #{tpu_custom_call.1} parent=1 // pred_region
      %13 = vsyncadd [#allocation3], 0
      %s15 = sshll.u32 %s1, 4
      %s16 = int_to_ptr.hbm [resolvable:$true] %s15
      %s17 = sshll.u32 [#allocation2], 4
      %s18 = int_to_ptr.vmem [resolvable:$true] %s17
      %20 = dma.hbm_to_vmem [thread:$0]  %s16, 256, %s18, [#allocation3]
    $region9: #{tpu_custom_call.1} parent=1 // pred_fallthru
      _
    // Predicated region
    $region10: #{tpu_custom_call.1} parent=1 // pred_check
      _
    $region11: #{tpu_custom_call.1} parent=1 // pred_check_branch
      %22 = sbr.rel (0) target = $region13
    $region12: #{tpu_custom_call.1} parent=1 // pred_region
      %24 = dma.done [#allocation3], 256
    $region13: #{tpu_custom_call.1} parent=1 // pred_fallthru
      _
    %v25 = vld [vmem:[%s0] sm:$0xff]
    %v26 = vld [vmem:[#allocation2] ss:$4 sm:$0xf]
    %s27 = scalar_lea.vmem [#allocation2], 1
    %v28 = vld [vmem:[%s27] ss:$4 sm:$0xf]
    %s29 = scalar_lea.vmem [#allocation2], 2
    %v30 = vld [vmem:[%s29] ss:$4 sm:$0xf]
    %v31 = vld [vmem:[#allocation2 + $0x3] sm:$0x1]
    %33 = vset.pattern.permute.xlu0 0
    %34 = vperm.xlu0 %33, %v25
    %v35 = vpop.permute.xlu0 %34
    %v38 = vperm.slane %v26, 0
    %v39 = vperm.slane %v26, 1
    %v40 = vperm.slane %v26, 2
    %v41 = vperm.slane %v26, 3
    %v46 = vmul.f32 %v35, %v38
    %v47 = vmul.f32 %v35, %v39
    %v48 = vmul.f32 %v35, %v40
    %v49 = vmul.f32 %v35, %v41
    %v51 = vperm.slane %v28, 0
    %v52 = vperm.slane %v28, 1
    %v53 = vperm.slane %v28, 2
    %v54 = vperm.slane %v28, 3
    %v59 = vadd.f32 %v46, %v51
    %v60 = vadd.f32 %v47, %v52
    %v61 = vadd.f32 %v48, %v53
    %v62 = vadd.f32 %v49, %v54
    %v64 = vperm.slane %v30, 0
    %v65 = vperm.slane %v30, 1
    %v66 = vperm.slane %v30, 2
    %v67 = vperm.slane %v30, 3
    %v72 = vmul.f32 %v59, %v64
    %v73 = vmul.f32 %v60, %v65
    %v74 = vmul.f32 %v61, %v66
    %v75 = vmul.f32 %v62, %v67
    %v76 = vadd.f32 %v72, %v73
    %v77 = vadd.f32 %v76, %v74
    %v78 = vadd.f32 %v77, %v75
    %79 = vadd.xlane.f32.xlu0 %v78
    %v80 = vpop.xlane.xlu0 %79
    %v81 = vperm.slane %v31, 0
    %v82 = vadd.f32 %v80, %v81
    %vm83 = vcmask 7168
    %84 = vst.msk [vmem:[%s2] sm:$0xff] %vm83, %v82
    // Predicated region
    $region14: #{tpu_custom_call.1} parent=1 // pred_check
      _
    $region15: #{tpu_custom_call.1} parent=1 // pred_check_branch
      %86 = sbr.rel (0) target = $region17
    $region16: #{tpu_custom_call.1} parent=1 // pred_region
      _
    $region17: #{tpu_custom_call.1} parent=1 // pred_fallthru
      _
    // Predicated region
    $region18: #{tpu_custom_call.1} parent=1 // pred_check
      _
    $region19: #{tpu_custom_call.1} parent=1 // pred_check_branch
      %88 = sbr.rel (0) target = $region21
    $region20: #{tpu_custom_call.1} parent=1 // pred_region
      _
    $region21: #{tpu_custom_call.1} parent=1 // pred_fallthru
      _
    %89 = vsyncpa [#allocation3], 1

</llo_original>
